<compile_context>
chip_gen: v6e
topology: v6e:2x2x1
jax: 0.10.0
libtpu: 0.0.40
codegen_flags: <defaults>
</compile_context>

<pallas_src>
import jax
import jax.numpy as jnp
from jax.experimental import pallas as pl
from jax.experimental.pallas import tpu as pltpu

_LANE = 128


def _normalization_kernel(stats_ref, img_ref, out_ref):
    # stats_ref: (BR, 2) f32 tile; column 0 = mean, column 1 = 1/std.
    # img_ref / out_ref: (BR, BC) tiles, BC lane-dense.
    mean = stats_ref[:, 0:1]       # (BR, 1) f32, broadcast along lanes
    inv_std = stats_ref[:, 1:2]    # (BR, 1) f32
    x = img_ref[...].astype(jnp.float32)
    out_ref[...] = ((x - mean) * inv_std).astype(out_ref.dtype)


def _round_up(x: int, m: int) -> int:
    return ((x + m - 1) // m) * m


def _row_unit(dtype) -> int:
    # Sub-32-bit dtypes pack along sublanes: native tile is (8*pack, 128).
    pack = max(1, 4 // jnp.dtype(dtype).itemsize)
    return 8 * pack


def _largest_aligned_divisor(total: int, unit: int, cap: int) -> int:
    """Largest block <= cap (elements) that is a multiple of `unit` and evenly
    divides `total`.  Requires total % unit == 0."""
    t_units = total // unit
    cap_units = max(1, min(cap // unit, t_units))
    for d in range(cap_units, 0, -1):
        if t_units % d == 0:
            return d * unit
    return unit


def _choose_blocks(R, L, itemsize, row_unit, target_bytes, min_bytes, min_steps):
    """Pick (block_rows, block_cols).  Guarantees block_bytes <= target_bytes
    (padding in the wrapper ensures any unaligned full-dim fallback is small)."""
    row_aligned = (R % row_unit == 0)
    col_aligned = (L % _LANE == 0)
    rows_min = row_unit if row_aligned else R

    # Columns: lane-dense (multiple of 128) or the full dim.
    if (not col_aligned) or (L * rows_min * itemsize <= target_bytes):
        block_cols = L
    else:
        col_cap = max(_LANE, target_bytes // (rows_min * itemsize))
        block_cols = _largest_aligned_divisor(L, _LANE, col_cap)

    # Rows: multiple of the dtype's sublane packing unit, capped so the stat
    # tile's 128-lane padding stays small.
    if not row_aligned:
        block_rows = R
    else:
        row_cap = max(row_unit, min(4096, target_bytes // max(1, block_cols * itemsize)))
        block_rows = _largest_aligned_divisor(R, row_unit, row_cap)

    # Give the software pipeline (and v7x's two TensorCores) work to overlap /
    # shard: aim for >= min_steps grid steps while keeping blocks >= min_bytes.
    def steps(br, bc):
        return (R // br) * (L // bc)

    while steps(block_rows, block_cols) < min_steps:
        if block_rows * block_cols * itemsize < 2 * min_bytes:
            break
        if (row_aligned and block_rows > row_unit
                and (block_rows // 2) % row_unit == 0 and R % (block_rows // 2) == 0):
            block_rows //= 2
        elif (col_aligned and block_cols > _LANE
                and (block_cols // 2) % _LANE == 0 and L % (block_cols // 2) == 0):
            block_cols //= 2
        else:
            break
    return block_rows, block_cols


def normalization(img: jax.Array, mean: jax.Array, std: jax.Array,
                  *, donate_input: bool = False) -> jax.Array:
    """img: (N, C, H, W); mean, std: per-channel stats (any view of C elements).

    Returns (img - mean[:, None, None]) / std[:, None, None], same dtype as img.
    """
    N, C, H, W = img.shape
    dtype = img.dtype
    itemsize = jnp.dtype(dtype).itemsize
    row_unit = _row_unit(dtype)

    R = N * C   # one row per (batch, channel)
    L = H * W   # lane-dense flattened spatial dim

    # ---- chip-aware sizing targets -----------------------------------------
    try:
        vmem_cap = int(getattr(pltpu.get_tpu_info(), "vmem_capacity_bytes",
                               64 * 1024 * 1024))
    except Exception:  # pragma: no cover - fall back to the smallest (v7x) VMEM
        vmem_cap = 64 * 1024 * 1024
    # 12 MiB blocks on 128 MiB-VMEM chips (v5e/v6e), 6 MiB on v7x (64 MiB).
    target_block_bytes = (12 << 20) if vmem_cap >= (96 << 20) else (6 << 20)
    min_block_bytes = 1 << 20   # keep blocks >= ~1 MiB (near-roofline tiles)
    min_steps = 4

    # ---- pad unaligned dims only when they are too big to be a single
    #      full-dim block (full-dim blocks are exempt from (8,128) rules) -----
    pad_rows = (R % row_unit != 0) and (R * _LANE * itemsize > target_block_bytes)
    R_p = _round_up(R, row_unit) if pad_rows else R
    rows_min = row_unit if (R_p % row_unit == 0) else R_p
    pad_cols = (L % _LANE != 0) and (L * rows_min * itemsize > target_block_bytes)
    L_p = _round_up(L, _LANE) if pad_cols else L

    # ---- flatten (free for contiguous NCHW); pad only if required ----------
    img2d = img.reshape(R, L)
    if (R_p, L_p) != (R, L):
        # TODO(synk): large unaligned shapes pay one extra HBM pass for the pad.
        img2d = jnp.pad(img2d, ((0, R_p - R), (0, L_p - L)))

    # ---- per-row stats merged into one (R_p, 2) f32 array ------------------
    mean_c = mean.reshape(C).astype(jnp.float32)
    inv_std_c = 1.0 / std.reshape(C).astype(jnp.float32)
    stats = jnp.stack([jnp.tile(mean_c, N), jnp.tile(inv_std_c, N)], axis=1)
    if R_p != R:
        stats = jnp.pad(stats, ((0, R_p - R), (0, 0)))

    # ---- block sizing -------------------------------------------------------
    block_rows, block_cols = _choose_blocks(
        R_p, L_p, itemsize, row_unit, target_block_bytes, min_block_bytes, min_steps)
    grid = (R_p // block_rows, L_p // block_cols)

    # ---- VMEM accounting -> derived limit (double-buffered in + out + stats)
    block_bytes = _round_up(block_rows, row_unit) * _round_up(block_cols, _LANE) * itemsize
    stat_tile_bytes = _round_up(block_rows, 8) * _LANE * 4   # (BR, 2) lane-pads to 128
    vmem_used = 4 * block_bytes + 2 * stat_tile_bytes
    vmem_limit = int(min(max(vmem_used * 5 // 4 + (2 << 20), 16 << 20),
                         max(32 << 20, vmem_cap * 4 // 5)))

    extra_kwargs = {}
    if donate_input:
        # Reuse img2d's HBM buffer for the output (input idx 1 -> output 0).
        extra_kwargs["input_output_aliases"] = {1: 0}

    out2d = pl.pallas_call(
        _normalization_kernel,
        out_shape=jax.ShapeDtypeStruct((R_p, L_p), dtype),
        grid=grid,
        in_specs=[
            pl.BlockSpec((block_rows, 2), lambda r, c: (r, 0)),            # stats
            pl.BlockSpec((block_rows, block_cols), lambda r, c: (r, c)),   # img
        ],
        out_specs=pl.BlockSpec((block_rows, block_cols), lambda r, c: (r, c)),
        compiler_params=pltpu.CompilerParams(
            dimension_semantics=("parallel", "parallel"),
            vmem_limit_bytes=vmem_limit,
        ),
        **extra_kwargs,
    )(stats, img2d)

    if (R_p, L_p) != (R, L):
        out2d = out2d[:R, :L]
    return out2d.reshape(N, C, H, W)


if __name__ == "__main__":
    key = jax.random.PRNGKey(0)
    N, C, H, W = 2, 4, 16, 16

    k_img, k_mean, k_std = jax.random.split(key, 3)
    img = jax.random.normal(k_img, (N, C, H, W), dtype=jnp.float32)
    # Deterministic "ImageNet-like" per-channel stats (synthetic, PRNGKey(0)).
    mean = jax.random.uniform(k_mean, (C,), minval=0.3, maxval=0.6, dtype=jnp.float32)
    std = jax.random.uniform(k_std, (C,), minval=0.2, maxval=0.3, dtype=jnp.float32)

    out = normalization(img, mean, std)
    out = jax.block_until_ready(out)

    # Reference check in plain JAX (mirrors the PyTorch broadcast semantics).
    ref = (img - mean.reshape(C, 1, 1)) / std.reshape(C, 1, 1)
    assert out.shape == (N, C, H, W)
    assert jnp.allclose(out, ref, atol=1e-5, rtol=1e-5)

    print("KERNEL_OK")
</pallas_src>

<mosaic_0001>
module attributes {stable_mosaic.version = 11 : i64} {
  func.func @_normalization_kernel(%arg0: i32, %arg1: i32, %arg2: memref<8x2xf32, #tpu.memory_space<vmem>>, %arg3: memref<8x256xf32, #tpu.memory_space<vmem>>, %arg4: memref<8x256xf32, #tpu.memory_space<vmem>>) attributes {dimension_semantics = [#tpu.dimension_semantics<parallel>, #tpu.dimension_semantics<parallel>], iteration_bounds = array<i64: 1, 1>, scalar_prefetch = 0 : i64, scratch_operands = 0 : i64, tpu.core_type = #tpu.core_type<tc>, window_params = [{transform_indices = @transform_0, window_bounds = array<i64: 8, 2>}, {transform_indices = @transform_1, window_bounds = array<i64: 8, 256>}, {transform_indices = @transform_2, window_bounds = array<i64: 8, 256>}]} {
    %c0 = arith.constant 0 : index
    %c0_0 = arith.constant 0 : index
    %0 = vector.load %arg2[%c0, %c0_0] : memref<8x2xf32, #tpu.memory_space<vmem>>, vector<8x1xf32>
    %c0_1 = arith.constant 0 : index
    %c1 = arith.constant 1 : index
    %1 = vector.load %arg2[%c0_1, %c1] : memref<8x2xf32, #tpu.memory_space<vmem>>, vector<8x1xf32>
    %c0_2 = arith.constant 0 : index
    %c0_3 = arith.constant 0 : index
    %2 = vector.load %arg3[%c0_2, %c0_3] : memref<8x256xf32, #tpu.memory_space<vmem>>, vector<8x256xf32>
    %3 = vector.broadcast %0 : vector<8x1xf32> to vector<8x256xf32>
    %4 = arith.subf %2, %3 : vector<8x256xf32>
    %5 = vector.broadcast %1 : vector<8x1xf32> to vector<8x256xf32>
    %6 = arith.mulf %4, %5 : vector<8x256xf32>
    %c0_4 = arith.constant 0 : index
    %c0_5 = arith.constant 0 : index
    %7 = vector.load %arg4[%c0_4, %c0_5] : memref<8x256xf32, #tpu.memory_space<vmem>>, vector<8x256xf32>
    tpu.vector_store %arg4[%c0_4, %c0_5], %6 {strides = array<i32>} : memref<8x256xf32, #tpu.memory_space<vmem>>, vector<8x256xf32>,
    return
  }
  func.func @transform_0(%arg0: i32, %arg1: i32) -> (i32, i32) {
    %c0_i32 = arith.constant 0 : i32
    %c0_i32_0 = arith.constant 0 : i32
    return %arg0, %c0_i32 : i32, i32
  }
  func.func @transform_1(%arg0: i32, %arg1: i32) -> (i32, i32) {
    %c0_i32 = arith.constant 0 : i32
    return %arg0, %arg1 : i32, i32
  }
  func.func @transform_2(%arg0: i32, %arg1: i32) -> (i32, i32) {
    %c0_i32 = arith.constant 0 : i32
    return %arg0, %arg1 : i32, i32
  }
}

</mosaic_0001>

<llo_original>
// kernel: tpu_custom_call.1
$region0: #{tpu_custom_call.1}
  #allocation0 [shape = 'u32[]', space=smem, size = 0x4, offset = 0x4, fixed_abs, tag = 'smem constant byte address 0x4 - core index']
  #allocation1 [shape = 'u32[144,128]{1,0:T(1,128)}', space=vmem, size = 0x12000, scoped, tag = 'internal scratch']
  %s0 = inlined_call_operand.vmem [shape: f32[8,2], index: 0, kind: input, shape index: {}]
  %s1 = inlined_call_operand.hbm [shape: f32[8,256], index: 1, kind: input, shape index: {}]
  %s2 = inlined_call_operand.hbm [shape: f32[8,256], index: 2, kind: output, shape index: {}]
  %s3 = sld [smem:[#allocation0]]
  $region22: #{tpu_custom_call.1} parent=0
    _
  %s5 = ssub.s32 1, %s3
  %s6 = scalar_select 0, %s5, %s3
  $region1: #{tpu_custom_call.1} parent=0
    #allocation2 [shape = 'u8[8192]{0}', space=vmem, size = 0x2000, scoped, tag = 'input window, operand 1, single buffered']
    #allocation3 [shape = 's32[1]{0}', space=sflag, size = 0x4, scoped, tag = 'scoped memory for tpu_custom_call.1']
    #allocation4 [shape = 's32[1]{0}', space=sflag, size = 0x4, scoped, tag = 'scoped memory for tpu_custom_call.1']
    #allocation5 [shape = 'u8[8192]{0}', space=vmem, size = 0x2000, scoped, tag = 'output window, operand 0, single buffered']
    %7 = vsyncpa [#allocation3], 0
    %8 = vsyncpa [#allocation4], 0
    // Predicated region
    $region2: #{tpu_custom_call.1} parent=1 // pred_check
      _
    $region3: #{tpu_custom_call.1} parent=1 // pred_check_branch
      %10 = sbr.rel (0) target = $region5
    $region4: #{tpu_custom_call.1} parent=1 // pred_region
      _
    $region5: #{tpu_custom_call.1} parent=1 // pred_fallthru
      _
    // Predicated region
    $region6: #{tpu_custom_call.1} parent=1 // pred_check
      _
    $region7: #{tpu_custom_call.1} parent=1 // pred_check_branch
      %12 = sbr.rel (0) target = $region9
    $region8: #{tpu_custom_call.1} parent=1 // pred_region
      %s14 = ssub.s32 256, 256
      %15 = vsyncadd [#allocation3], %s14
      %s17 = sshll.u32 [#allocation2], 4
      %s18 = int_to_ptr.vmem [resolvable:$true] %s17
      %20 = dma.hbm_to_vmem [thread:$0]  %s1, 256, %s18, [#allocation3]
    $region9: #{tpu_custom_call.1} parent=1 // pred_fallthru
      _
    // Predicated region
    $region10: #{tpu_custom_call.1} parent=1 // pred_check
      _
    $region11: #{tpu_custom_call.1} parent=1 // pred_check_branch
      %22 = sbr.rel (0) target = $region13
    $region12: #{tpu_custom_call.1} parent=1 // pred_region
      %23 = dma.done [#allocation3], 256
    $region13: #{tpu_custom_call.1} parent=1 // pred_fallthru
      _
    %v24 = vld [vmem:[%s0] sm:$0xff]
    %v25 = vld [vmem:[#allocation2] sm:$0xff]
    %v26 = vld [vmem:[#allocation2 + $0x8] sm:$0xff]
    %28 = vset.pattern.permute.xlu0 0
    %29 = vperm.xlu0 %28, %v24
    %v30 = vpop.permute.xlu0 %29
    %v32 = vsub.f32 %v25, %v30
    %v33 = vsub.f32 %v26, %v30
    %34 = vset.pattern.permute.xlu0 1
    %35 = vperm.xlu0 %34, %v24
    %v36 = vpop.permute.xlu0 %35
    %v38 = vmul.f32 %v32, %v36
    %v39 = vmul.f32 %v33, %v36
    %40 = vst [vmem:[#allocation5] sm:$0xff] %v38
    %41 = vst [vmem:[#allocation5 + $0x8] sm:$0xff] %v39
    // Predicated region
    $region14: #{tpu_custom_call.1} parent=1 // pred_check
      _
    $region15: #{tpu_custom_call.1} parent=1 // pred_check_branch
      %43 = sbr.rel (0) target = $region17
    $region16: #{tpu_custom_call.1} parent=1 // pred_region
      %s45 = ssub.s32 256, 256
      %46 = vsyncadd [#allocation4], %s45
      %s48 = sshll.u32 [#allocation5], 4
      %s49 = int_to_ptr.vmem [resolvable:$true] %s48
      %51 = dma.vmem_to_hbm [thread:$0]  %s49, 256, %s2, [#allocation4]
    $region17: #{tpu_custom_call.1} parent=1 // pred_fallthru
      _
    // Predicated region
    $region18: #{tpu_custom_call.1} parent=1 // pred_check
      _
    $region19: #{tpu_custom_call.1} parent=1 // pred_check_branch
      %53 = sbr.rel (0) target = $region21
    $region20: #{tpu_custom_call.1} parent=1 // pred_region
      %54 = dma.done [#allocation4], 256
    $region21: #{tpu_custom_call.1} parent=1 // pred_fallthru
      _
    %55 = vsyncpa [#allocation3], 1
    %56 = vsyncpa [#allocation4], 1

</llo_original>
